<compile_context>
chip_gen: v5e
topology: v5e:2x2
jax: 0.10.0
libtpu: 0.0.40
codegen_flags: <defaults>
</compile_context>

<pallas_src>
import jax
import jax.numpy as jnp
from jax.experimental import pallas as pl
from jax.experimental.pallas import tpu as pltpu


_LANE = 128
_VMEM_LIMIT_BYTES = 32 * 1024 * 1024  # safe scoped limit on v5e/v6e/v7x


def _pick_target_tile_bytes() -> int:
    # 2 MiB blocks are past the bandwidth knee everywhere (measured f32-add
    # roofline: 1 MiB tile ~85%, 4 MiB ~86%).  On v6e/v7x HBM is fast enough
    # that the ~0.35us per-grid-step overhead is relatively expensive, so use
    # 4 MiB there.  Worst-case fused-stack live VMEM at 4 MiB input blocks is
    # 2*4 + 2*8 = 24 MiB, under the 32 MiB scoped limit on every chip, so a
    # false positive here is still safe.
    tile = 2 << 20
    try:
        ver = str(pltpu.get_tpu_info())
        if ("v6" in ver) or ("v7" in ver) or ("6" in ver and "7" in ver):
            tile = 4 << 20
    except Exception:
        pass
    return tile


_TARGET_TILE_BYTES = _pick_target_tile_bytes()


def _cdiv(a: int, b: int) -> int:
    return (a + b - 1) // b


def _round_up(a: int, m: int) -> int:
    return _cdiv(a, m) * m


def _min_sublane(dtype) -> int:
    # 8 for 4-byte dtypes, 16 for bf16/f16, 32 for int8/fp8.
    return max(8, 32 // jnp.dtype(dtype).itemsize)


def _choose_block(rows: int, cols: int, dtype):
    """Pick a (tr, tc) block.  Blocks never need to divide the array extents:
    grids use cdiv and edge blocks are masked, so there is no padding."""
    itemsize = jnp.dtype(dtype).itemsize
    min_sub = _min_sublane(dtype)
    budget = _TARGET_TILE_BYTES

    # Lane (last-dim) block: full width when it fits the budget at min_sub
    # rows, otherwise the largest multiple of 128 within budget.
    max_tc = max(_LANE, (budget // (min_sub * itemsize)) // _LANE * _LANE)
    tc = cols if cols <= max_tc else max_tc  # full dim OR multiple of 128

    max_tr = max(min_sub, (budget // (tc * itemsize)) // min_sub * min_sub)
    tr = rows if rows <= max_tr else max_tr  # full dim OR multiple of min_sub

    # Megacore heuristic (gated): only when the whole array would be a single
    # >=2 MiB block do we split the rows axis in two, so v7x's 2 TensorCores
    # can each take a >=1 MiB half; the one extra ~0.35us grid step is
    # negligible next to a >=1 MiB DMA on 1-TC chips.
    if (_cdiv(rows, tr) == 1 and _cdiv(cols, tc) == 1
            and tr * tc * itemsize >= 2 * (1 << 20) and rows >= 2 * min_sub):
        tr = _round_up(_cdiv(rows, 2), min_sub)

    return tr, tc


def _as_slab(x):
    """Lane-dense 2-D view of an NCHW image (free contiguous reshape)."""
    B, C, H, W = x.shape
    n = B * C * H * W
    if n % _LANE == 0:
        return x.reshape(n // _LANE, _LANE), (B, C, H, W)
    # Element count not lane-aligned: keep the natural (B*C, H*W) view; edge
    # lanes use masked stores (correct, slightly lower store throughput).
    return x.reshape(B * C, H * W), (B, C, H, W)


def _compiler_params():
    return pltpu.CompilerParams(
        dimension_semantics=("parallel", "parallel"),
        vmem_limit_bytes=_VMEM_LIMIT_BYTES,
    )


# ----------------------------------------------------------------------------
# Pallas kernels (operate on 2-D slabs)
# ----------------------------------------------------------------------------
def _elementwise_2d(x2d, tile_fn):
    """One pallas_call applying a per-element `tile_fn` tile-by-tile."""
    rows, cols = x2d.shape
    tr, tc = _choose_block(rows, cols, x2d.dtype)
    nbytes = rows * cols * jnp.dtype(x2d.dtype).itemsize

    def kernel(x_ref, o_ref):
        o_ref[...] = tile_fn(x_ref[...]).astype(o_ref.dtype)

    return pl.pallas_call(
        kernel,
        out_shape=jax.ShapeDtypeStruct((rows, cols), x2d.dtype),
        grid_spec=pltpu.PrefetchScalarGridSpec(
            num_scalar_prefetch=0,
            grid=(_cdiv(rows, tr), _cdiv(cols, tc)),
            in_specs=[pl.BlockSpec((tr, tc), lambda i, j: (i, j))],
            out_specs=pl.BlockSpec((tr, tc), lambda i, j: (i, j)),
        ),
        compiler_params=_compiler_params(),
        cost_estimate=pl.CostEstimate(
            flops=0, transcendentals=0, bytes_accessed=2 * nbytes),
        # TODO(synk): input_output_aliases={0: 0} would drop one HBM
        # allocation, but is only safe when every caller runs under jit
        # (eager callers still hold x); left off for eager safety.
    )(x2d)


def _stack_fused_2d(x2d, tile_fn_a, tile_fn_b):
    """Read each x tile once, write both transformed copies -> (2, rows, cols).
    Total HBM traffic 3N vs 4N for separate transforms + concatenate."""
    rows, cols = x2d.shape
    tr, tc = _choose_block(rows, cols, x2d.dtype)
    nbytes = rows * cols * jnp.dtype(x2d.dtype).itemsize

    def kernel(x_ref, o_ref):
        t = x_ref[...]
        o_ref[0] = tile_fn_a(t).astype(o_ref.dtype)
        o_ref[1] = tile_fn_b(t).astype(o_ref.dtype)

    return pl.pallas_call(
        kernel,
        out_shape=jax.ShapeDtypeStruct((2, rows, cols), x2d.dtype),
        grid_spec=pltpu.PrefetchScalarGridSpec(
            num_scalar_prefetch=0,
            grid=(_cdiv(rows, tr), _cdiv(cols, tc)),
            in_specs=[pl.BlockSpec((tr, tc), lambda i, j: (i, j))],
            out_specs=pl.BlockSpec((2, tr, tc), lambda i, j: (0, i, j)),
        ),
        compiler_params=_compiler_params(),
        cost_estimate=pl.CostEstimate(
            flops=0, transcendentals=0, bytes_accessed=3 * nbytes),
    )(x2d)


# ----------------------------------------------------------------------------
# Transform classes mirroring the PyTorch API
# ----------------------------------------------------------------------------
class Transform:
    """Base class for image transforms (JAX/Pallas version).

    Multiply transforms to chain them (direct product of groups); add
    transforms to stack the transformed images along the batch dimension.
    """

    def __init__(self, *args, n_trans: int = 1, rng=None, **kwargs):
        self.n_trans = n_trans
        self.rng = jax.random.PRNGKey(0) if rng is None else rng

    # -- Pallas-side fusion hooks --------------------------------------------
    def tile_fn(self):
        """Strictly per-element VMEM-tile form of this transform, or None if
        it cannot be tile-fused (batch-changing, spatial, reducing, ...)."""
        return None

    def is_identity(self) -> bool:
        return False

    # -- torch-mirroring API ---------------------------------------------------
    def forward(self, x):
        raise NotImplementedError()

    def __call__(self, x):
        return self.forward(x)

    def __mul__(self, other):
        return ChainTransform(self, other)

    def __add__(self, other):
        return StackTransform(self, other)


class ChainTransform(Transform):
    """(t1 * t2)(x) == t2(t1(x)); fused into one pallas_call when possible."""

    def __init__(self, t1, t2):
        super().__init__()
        self.t1, self.t2 = t1, t2

    def tile_fn(self):
        f1, f2 = self.t1.tile_fn(), self.t2.tile_fn()
        if f1 is None or f2 is None:
            return None
        return lambda t: f2(f1(t))

    def is_identity(self):
        return self.t1.is_identity() and self.t2.is_identity()

    def forward(self, x):
        if self.is_identity():
            return x  # identity o identity: no kernel, no HBM copy
        fused = self.tile_fn()
        if fused is not None:
            # Both stages applied to the tile while it sits in VMEM: one HBM
            # read + one write instead of two full round trips.
            x2d, (B, C, H, W) = _as_slab(x)
            return _elementwise_2d(x2d, fused).reshape(B, C, H, W)
        return self.t2(self.t1(x))


class StackTransform(Transform):
    """(t1 + t2)(x) == concat((t1(x), t2(x)), axis=0)."""

    def __init__(self, t1, t2):
        super().__init__()
        self.t1, self.t2 = t1, t2

    def forward(self, x):
        f1, f2 = self.t1.tile_fn(), self.t2.tile_fn()
        if f1 is not None and f2 is not None:
            # Fused fan-out: each input tile is DMA'd from HBM exactly once.
            x2d, (B, C, H, W) = _as_slab(x)
            return _stack_fused_2d(x2d, f1, f2).reshape(2 * B, C, H, W)
        # Non-fusable stages: XLA concatenate already does one read + one
        # write per input; a custom copy kernel cannot beat that.
        return jnp.concatenate([self.t1(x), self.t2(x)], axis=0)


class IdentityTransform(Transform):
    """Concrete per-element transform: identity (the deepinv subclass hook)."""

    def tile_fn(self):
        return lambda t: t

    def is_identity(self):
        return True

    def forward(self, x):
        # Pure identity: an HBM->HBM copy kernel can never beat returning x.
        return x


class ScaleTransform(Transform):
    """Demo per-element transform: multiply by a scalar gain."""

    def __init__(self, gain):
        super().__init__()
        self.gain = float(gain)

    def tile_fn(self):
        g = self.gain
        return lambda t: t * jnp.asarray(g, dtype=t.dtype)

    def forward(self, x):
        x2d, (B, C, H, W) = _as_slab(x)
        return _elementwise_2d(x2d, self.tile_fn()).reshape(B, C, H, W)


# ----------------------------------------------------------------------------
# Demo / self-test
# ----------------------------------------------------------------------------
if __name__ == "__main__":
    key = jax.random.PRNGKey(0)
    B, C, H, W = 2, 4, 16, 16
    x = jax.random.normal(key, (B, C, H, W), dtype=jnp.float32)

    t_id = IdentityTransform()
    t_sc = ScaleTransform(2.0)

    # 1) Single transform through the Pallas elementwise kernel (under jit).
    y = jax.block_until_ready(jax.jit(lambda v: t_sc(v))(x))
    assert y.shape == (B, C, H, W)
    assert jnp.allclose(y, 2.0 * x)

    # 2) Chained transform: (t1 * t2)(x) == t2(t1(x)) -- fused single pallas_call.
    chained = jax.block_until_ready(jax.jit(lambda v: (t_sc * t_id)(v))(x))
    assert chained.shape == (B, C, H, W)
    assert jnp.allclose(chained, 2.0 * x)

    # 3) Identity chain short-circuits: no kernel, no copy.
    ident = jax.block_until_ready(jax.jit(lambda v: (t_id * t_id)(v))(x))
    assert jnp.allclose(ident, x)

    # 4) Stacked transform: (t1 + t2)(x) == cat((t1(x), t2(x)), dim=0) -- fused
    #    fan-out kernel (each x tile read from HBM once).
    stacked = jax.block_until_ready(jax.jit(lambda v: (t_id + t_sc)(v))(x))
    assert stacked.shape == (2 * B, C, H, W)
    assert jnp.allclose(stacked, jnp.concatenate([x, 2.0 * x], axis=0))

    # 5) Non-fusable chain (stack inside a chain) exercises the fallback path.
    nested = jax.block_until_ready(jax.jit(lambda v: ((t_id + t_sc) * t_id)(v))(x))
    assert nested.shape == (2 * B, C, H, W)
    assert jnp.allclose(nested, jnp.concatenate([x, 2.0 * x], axis=0))

    # 6) Lane-unaligned element count exercises the fallback (B*C, H*W) slab
    #    with masked edge stores (still no pad / slice).
    x_odd = jax.random.normal(jax.random.PRNGKey(1), (2, 3, 5, 7), jnp.float32)
    odd = jax.block_until_ready(jax.jit(lambda v: (t_id + t_sc)(v))(x_odd))
    assert odd.shape == (4, 3, 5, 7)
    assert jnp.allclose(odd, jnp.concatenate([x_odd, 2.0 * x_odd], axis=0))

    print("KERNEL_OK")
</pallas_src>

<mosaic_0001>
module attributes {stable_mosaic.version = 11 : i64} {
  func.func @kernel(%arg0: i32, %arg1: i32, %arg2: memref<16x128xf32, #tpu.memory_space<vmem>>, %arg3: memref<16x128xf32, #tpu.memory_space<vmem>>) attributes {dimension_semantics = [#tpu.dimension_semantics<parallel>, #tpu.dimension_semantics<parallel>], iteration_bounds = array<i64: 1, 1>, scalar_prefetch = 0 : i64, scratch_operands = 0 : i64, tpu.core_type = #tpu.core_type<tc>, window_params = [{transform_indices = @transform_0, window_bounds = array<i64: 16, 128>}, {transform_indices = @transform_1, window_bounds = array<i64: 16, 128>}]} {
    %c0 = arith.constant 0 : index
    %c0_0 = arith.constant 0 : index
    %0 = vector.load %arg2[%c0, %c0_0] : memref<16x128xf32, #tpu.memory_space<vmem>>, vector<16x128xf32>
    %cst = arith.constant 2.000000e+00 : f32
    %1 = vector.broadcast %cst : f32 to vector<16x128xf32>
    %2 = arith.mulf %0, %1 : vector<16x128xf32>
    %c0_1 = arith.constant 0 : index
    %c0_2 = arith.constant 0 : index
    %3 = vector.load %arg3[%c0_1, %c0_2] : memref<16x128xf32, #tpu.memory_space<vmem>>, vector<16x128xf32>
    tpu.vector_store %arg3[%c0_1, %c0_2], %2 {strides = array<i32>} : memref<16x128xf32, #tpu.memory_space<vmem>>, vector<16x128xf32>,
    return
  }
  func.func @transform_0(%arg0: i32, %arg1: i32) -> (i32, i32) {
    %c0_i32 = arith.constant 0 : i32
    return %arg0, %arg1 : i32, i32
  }
  func.func @transform_1(%arg0: i32, %arg1: i32) -> (i32, i32) {
    %c0_i32 = arith.constant 0 : i32
    return %arg0, %arg1 : i32, i32
  }
}

</mosaic_0001>

<llo_original>
// kernel: _lambda_.1
$region0: #{_lambda_.1}
  #allocation0 [shape = 'u32[]', space=smem, size = 0x4, offset = 0x4, fixed_abs, tag = 'smem constant byte address 0x4 - core index']
  #allocation1 [shape = 'u32[72,128]{1,0:T(1,128)}', space=vmem, size = 0x9000, scoped, tag = 'internal scratch']
  %s0 = inlined_call_operand.vmem [shape: f32[16,128], index: 0, kind: input, shape index: {}]
  %s1 = inlined_call_operand.vmem [shape: f32[16,128], index: 1, kind: output, shape index: {}]
  %s2 = sld [smem:[#allocation0]]
  $region14: #{_lambda_.1} parent=0
    _
  %s4 = ssub.s32 1, %s2
  %s5 = scalar_select 0, %s4, %s2
  // Predicated region
  $region2: #{_lambda_.1} parent=0 // pred_check
    _
  $region3: #{_lambda_.1} parent=0 // pred_check_branch
    %7 = sbr.rel (0) target = $region5
  $region4: #{_lambda_.1} parent=0 // pred_region
    _
  $region5: #{_lambda_.1} parent=0 // pred_fallthru
    _
  %v8 = vld [vmem:[%s0] sm:$0xff]
  %v9 = vld [vmem:[%s0 + $0x8] sm:$0xff]
  %v10 = vmul.f32 %v8, 2.0
  %v11 = vmul.f32 %v9, 2.0
  %12 = vst [vmem:[%s1] sm:$0xff] %v10
  %13 = vst [vmem:[%s1 + $0x8] sm:$0xff] %v11
  // Predicated region
  $region6: #{_lambda_.1} parent=0 // pred_check
    _
  $region7: #{_lambda_.1} parent=0 // pred_check_branch
    %15 = sbr.rel (0) target = $region9
  $region8: #{_lambda_.1} parent=0 // pred_region
    _
  $region9: #{_lambda_.1} parent=0 // pred_fallthru
    _
  // Predicated region
  $region10: #{_lambda_.1} parent=0 // pred_check
    _
  $region11: #{_lambda_.1} parent=0 // pred_check_branch
    %17 = sbr.rel (0) target = $region13
  $region12: #{_lambda_.1} parent=0 // pred_region
    _
  $region13: #{_lambda_.1} parent=0 // pred_fallthru
    _

</llo_original>
